<compile_context>
chip_gen: v7x
topology: tpu7x:2x2x1
jax: 0.10.0
libtpu: 0.0.40
codegen_flags: <defaults>
</compile_context>

<pallas_src>
import functools

import jax
import jax.numpy as jnp
from jax.experimental import pallas as pl
from jax.experimental.pallas import tpu as pltpu


def critic_kernel(x_ref,      # (C, Bt*HW)          state, channels on sublanes, batch*HW on lanes
                  aT_ref,     # (A, Bt)             action, transposed in wrapper
                  wT_ref,     # (hidden, C)         fused transition+core weight (transposed)
                  b_ref,      # (hidden, 1)         fused conv bias (column)
                  w1T_ref,    # (hidden, hidden+A)  fused head L1 weight^T, feat half pre-scaled by 1/HW
                  b1_ref,     # (hidden, 1)
                  w2_ref,     # (hidden, 1)         head L2 weight (column)
                  b2_ref,     # (1, 1)
                  out_ref,    # (1, Bt)
                  *, Bt, HW):
    # Fused 1x1 conv + ReLU over the whole batch block: a single MXU pass with
    # the lane axis = Bt*HW (fully lane-dense), one bias broadcast, one ReLU.
    z = jnp.dot(wT_ref[...], x_ref[...],
                preferred_element_type=jnp.float32) + b_ref[...]       # (hidden, Bt*HW)
    z = jnp.maximum(z, 0.0)

    # Spatial SUM per batch row (the mean's 1/HW is folded into w1T).  Static
    # lane slices at multiples of HW (=256) stay in vregs -- no VMEM scratch,
    # no relayout, just XLU reduces + a tiny lane concat.
    cols = [jnp.sum(z[:, i * HW:(i + 1) * HW], axis=-1, keepdims=True)
            for i in range(Bt)]
    featT = jnp.concatenate(cols, axis=-1)                             # (hidden, Bt)

    # Fused head layer 1: single K=(hidden+A) MXU pass on [featT; aT].
    xcat = jnp.concatenate([featT, aT_ref[...]], axis=0)               # (hidden+A, Bt)
    hT = jnp.dot(w1T_ref[...], xcat,
                 preferred_element_type=jnp.float32) + b1_ref[...]     # (hidden, Bt)
    hT = jnp.maximum(hT, 0.0)

    # Final Linear(hidden, 1): VPU multiply + sublane reduce (no N=1 MXU pass).
    out_ref[...] = jnp.sum(hT * w2_ref[...], axis=0, keepdims=True) + b2_ref[...]


def prepare_critic_params(params, hw):
    """One-time (init-time) algebraic fusion of all weights into kernel form."""
    # transition (1x1) folded into core (1x1): both linear, no nonlinearity between.
    w_fused = params["w_tr"] @ params["w_core"]                        # (C_in, hidden)
    b_fused = params["b_tr"] @ params["w_core"] + params["b_core"]     # (1, hidden)
    # 1/HW of the spatial mean folded into the feature half of the head weight,
    # then feat/action halves concatenated into a single L1 weight (K = hidden+A,
    # already a multiple of 8 -> sublane aligned, no padding needed).
    w1cat = jnp.concatenate([params["w1f"] * (1.0 / hw), params["w1a"]], axis=0)
    return {
        "wT":  jnp.transpose(w_fused),                                 # (hidden, C_in)
        "b":   jnp.transpose(b_fused),                                 # (hidden, 1)
        "w1T": jnp.transpose(w1cat),                                   # (hidden, hidden+A)
        "b1":  jnp.transpose(params["b1"]),                            # (hidden, 1)
        "w2":  params["w2"],                                           # (hidden, 1)
        "b2":  params["b2"],                                           # (1, 1)
    }


def critic_forward(state_nchw, action, prep):
    B, C, H, W = state_nchw.shape
    HW = H * W
    A = action.shape[1]

    # (B, C, H, W) -> (C, B*HW): one tiny XLA transpose so the kernel sees a
    # single lane-dense operand and issues ONE MXU pass for the fused conv.
    x = jnp.transpose(state_nchw.reshape(B, C, HW), (1, 0, 2)).reshape(C, B * HW)
    aT = jnp.transpose(action)                                         # (A, B)

    # Single grid step at these tiny sizes (everything is a few KiB).  For
    # large B: pick Bt as a multiple of 128 (keeps the (A, Bt)/(1, Bt) blocks
    # lane-dense and (8,128)-legal), require B % Bt == 0, and use >=2 grid
    # steps so the "parallel" batch axis shards across v7x's two TensorCores.
    Bt = B
    grid = (B // Bt,)

    kernel = functools.partial(critic_kernel, Bt=Bt, HW=HW)

    def full_spec(arr):
        nd = arr.ndim
        return pl.BlockSpec(arr.shape, lambda b, _nd=nd: (0,) * _nd)

    grid_spec = pltpu.PrefetchScalarGridSpec(
        num_scalar_prefetch=0,
        grid=grid,
        in_specs=[
            pl.BlockSpec((C, Bt * HW), lambda b: (0, b)),              # state block
            pl.BlockSpec((A, Bt), lambda b: (0, b)),                   # action block
            full_spec(prep["wT"]), full_spec(prep["b"]),
            full_spec(prep["w1T"]), full_spec(prep["b1"]),
            full_spec(prep["w2"]), full_spec(prep["b2"]),
        ],
        out_specs=pl.BlockSpec((1, Bt), lambda b: (0, b)),
    )

    qT = pl.pallas_call(
        kernel,
        out_shape=jax.ShapeDtypeStruct((1, B), jnp.float32),
        grid_spec=grid_spec,
        compiler_params=pltpu.CompilerParams(
            dimension_semantics=("parallel",)),                        # effective once grid > 1
    )(x, aT, prep["wT"], prep["b"], prep["w1T"], prep["b1"], prep["w2"], prep["b2"])

    return qT.reshape(B, 1)


critic_forward_jit = jax.jit(critic_forward)


def critic_reference(state_nchw, action, params):
    B, C, H, W = state_nchw.shape
    x = jnp.transpose(state_nchw, (0, 2, 3, 1)).reshape(B, H * W, C)
    y = x @ params["w_tr"] + params["b_tr"]
    z = jax.nn.relu(y @ params["w_core"] + params["b_core"])
    feat = jnp.mean(z, axis=1)
    h = jax.nn.relu(feat @ params["w1f"] + action @ params["w1a"] + params["b1"])
    return h @ params["w2"] + params["b2"]


def init_params(key, hidden_size, action_size):
    ks = jax.random.split(key, 8)
    s = 0.1
    return {
        # transition Conv2d(4, 3, 1): weight stored as (C_in, C_out)
        "w_tr":   s * jax.random.normal(ks[0], (4, 3), jnp.float32),
        "b_tr":   s * jax.random.normal(ks[1], (1, 3), jnp.float32),
        # synthetic core Conv2d(3, hidden, 1) (+ ReLU in forward)
        "w_core": s * jax.random.normal(ks[2], (3, hidden_size), jnp.float32),
        "b_core": s * jax.random.normal(ks[3], (1, hidden_size), jnp.float32),
        # head Linear(hidden + action, hidden) split into feat / action halves
        "w1f":    s * jax.random.normal(ks[4], (hidden_size, hidden_size), jnp.float32),
        "w1a":    s * jax.random.normal(ks[5], (action_size, hidden_size), jnp.float32),
        "b1":     s * jax.random.normal(ks[6], (1, hidden_size), jnp.float32),
        # head Linear(hidden, 1)
        "w2":     s * jax.random.normal(ks[7], (hidden_size, 1), jnp.float32),
        "b2":     jnp.zeros((1, 1), jnp.float32),
    }


if __name__ == "__main__":
    B, C, H, W = 2, 4, 16, 16
    hidden_size, action_size = 32, 8

    key = jax.random.PRNGKey(0)
    k_state, k_action, k_params = jax.random.split(key, 3)

    state = jax.random.normal(k_state, (B, C, H, W), jnp.float32)
    action = jax.random.normal(k_action, (B, action_size), jnp.float32)
    params = init_params(k_params, hidden_size, action_size)

    # Weight prep happens once, off the per-call path.
    prep = jax.tree_util.tree_map(jax.block_until_ready,
                                  prepare_critic_params(params, H * W))

    q = critic_forward_jit(state, action, prep)
    q = jax.block_until_ready(q)

    q_ref = critic_reference(state, action, params)
    assert q.shape == (B, 1)
    assert jnp.allclose(q, q_ref, atol=1e-4, rtol=1e-4), (q, q_ref)

    print("KERNEL_OK")
</pallas_src>

<mosaic_0001>
module attributes {stable_mosaic.version = 11 : i64} {
  func.func @critic_kernel(%arg0: i32, %arg1: memref<4x512xf32, #tpu.memory_space<vmem>>, %arg2: memref<8x2xf32, #tpu.memory_space<vmem>>, %arg3: memref<32x4xf32, #tpu.memory_space<vmem>>, %arg4: memref<32x1xf32, #tpu.memory_space<vmem>>, %arg5: memref<32x40xf32, #tpu.memory_space<vmem>>, %arg6: memref<32x1xf32, #tpu.memory_space<vmem>>, %arg7: memref<32x1xf32, #tpu.memory_space<vmem>>, %arg8: memref<1x1xf32, #tpu.memory_space<vmem>>, %arg9: memref<1x2xf32, #tpu.memory_space<vmem>>) attributes {dimension_semantics = [#tpu.dimension_semantics<parallel>], iteration_bounds = array<i64: 1>, scalar_prefetch = 0 : i64, scratch_operands = 0 : i64, tpu.core_type = #tpu.core_type<tc>, window_params = [{transform_indices = @transform_0, window_bounds = array<i64: 4, 512>}, {transform_indices = @transform_1, window_bounds = array<i64: 8, 2>}, {pipeline_mode = #tpu.pipeline_mode<synchronous>, transform_indices = @transform_2, window_bounds = array<i64: 32, 4>}, {pipeline_mode = #tpu.pipeline_mode<synchronous>, transform_indices = @transform_3, window_bounds = array<i64: 32, 1>}, {pipeline_mode = #tpu.pipeline_mode<synchronous>, transform_indices = @transform_4, window_bounds = array<i64: 32, 40>}, {pipeline_mode = #tpu.pipeline_mode<synchronous>, transform_indices = @transform_5, window_bounds = array<i64: 32, 1>}, {pipeline_mode = #tpu.pipeline_mode<synchronous>, transform_indices = @transform_6, window_bounds = array<i64: 32, 1>}, {pipeline_mode = #tpu.pipeline_mode<synchronous>, transform_indices = @transform_7, window_bounds = array<i64: 1, 1>}, {transform_indices = @transform_8, window_bounds = array<i64: 1, 2>}]} {
    %c0 = arith.constant 0 : index
    %c0_0 = arith.constant 0 : index
    %0 = vector.load %arg3[%c0, %c0_0] : memref<32x4xf32, #tpu.memory_space<vmem>>, vector<32x4xf32>
    %c0_1 = arith.constant 0 : index
    %c0_2 = arith.constant 0 : index
    %1 = vector.load %arg1[%c0_1, %c0_2] : memref<4x512xf32, #tpu.memory_space<vmem>>, vector<4x512xf32>
    %cst = arith.constant dense<0.000000e+00> : vector<32x512xf32>
    %2 = tpu.matmul %0, %1, %cst {dimension_numbers = #tpu.dot_dimension_numbers<[1], [0], [0], [1], [0, 0, 1, 1], [], []>} : vector<32x4xf32>, vector<4x512xf32>, vector<32x512xf32> -> vector<32x512xf32>
    %c0_3 = arith.constant 0 : index
    %c0_4 = arith.constant 0 : index
    %3 = vector.load %arg4[%c0_3, %c0_4] : memref<32x1xf32, #tpu.memory_space<vmem>>, vector<32x1xf32>
    %4 = vector.broadcast %3 : vector<32x1xf32> to vector<32x512xf32>
    %5 = arith.addf %2, %4 : vector<32x512xf32>
    %cst_5 = arith.constant 0.000000e+00 : f32
    %6 = vector.broadcast %cst_5 : f32 to vector<32x512xf32>
    %7 = arith.maximumf %5, %6 : vector<32x512xf32>
    %8 = vector.extract_strided_slice %7 {offsets = [0, 0], sizes = [32, 256], strides = [1, 1]} : vector<32x512xf32> to vector<32x256xf32>
    %cst_6 = arith.constant dense<0.000000e+00> : vector<32xf32>
    %9 = vector.multi_reduction <add>, %8, %cst_6 [1] : vector<32x256xf32> to vector<32xf32>
    %10 = vector.shape_cast %9 : vector<32xf32> to vector<32x1xf32>
    %11 = vector.extract_strided_slice %7 {offsets = [0, 256], sizes = [32, 256], strides = [1, 1]} : vector<32x512xf32> to vector<32x256xf32>
    %cst_7 = arith.constant dense<0.000000e+00> : vector<32xf32>
    %12 = vector.multi_reduction <add>, %11, %cst_7 [1] : vector<32x256xf32> to vector<32xf32>
    %13 = vector.shape_cast %12 : vector<32xf32> to vector<32x1xf32>
    %14 = tpu.concatenate %10, %13 in 1 : vector<32x1xf32>, vector<32x1xf32> -> vector<32x2xf32>
    %c0_8 = arith.constant 0 : index
    %c0_9 = arith.constant 0 : index
    %15 = vector.load %arg2[%c0_8, %c0_9] : memref<8x2xf32, #tpu.memory_space<vmem>>, vector<8x2xf32>
    %16 = tpu.concatenate %14, %15 in 0 : vector<32x2xf32>, vector<8x2xf32> -> vector<40x2xf32>
    %c0_10 = arith.constant 0 : index
    %c0_11 = arith.constant 0 : index
    %17 = vector.load %arg5[%c0_10, %c0_11] : memref<32x40xf32, #tpu.memory_space<vmem>>, vector<32x40xf32>
    %cst_12 = arith.constant dense<0.000000e+00> : vector<32x2xf32>
    %18 = tpu.matmul %17, %16, %cst_12 {dimension_numbers = #tpu.dot_dimension_numbers<[1], [0], [0], [1], [0, 0, 1, 1], [], []>} : vector<32x40xf32>, vector<40x2xf32>, vector<32x2xf32> -> vector<32x2xf32>
    %c0_13 = arith.constant 0 : index
    %c0_14 = arith.constant 0 : index
    %19 = vector.load %arg6[%c0_13, %c0_14] : memref<32x1xf32, #tpu.memory_space<vmem>>, vector<32x1xf32>
    %20 = vector.broadcast %19 : vector<32x1xf32> to vector<32x2xf32>
    %21 = arith.addf %18, %20 : vector<32x2xf32>
    %cst_15 = arith.constant 0.000000e+00 : f32
    %22 = vector.broadcast %cst_15 : f32 to vector<32x2xf32>
    %23 = arith.maximumf %21, %22 : vector<32x2xf32>
    %c0_16 = arith.constant 0 : index
    %c0_17 = arith.constant 0 : index
    %24 = vector.load %arg7[%c0_16, %c0_17] : memref<32x1xf32, #tpu.memory_space<vmem>>, vector<32x1xf32>
    %25 = vector.broadcast %24 : vector<32x1xf32> to vector<32x2xf32>
    %26 = arith.mulf %23, %25 : vector<32x2xf32>
    %cst_18 = arith.constant dense<0.000000e+00> : vector<2xf32>
    %27 = vector.multi_reduction <add>, %26, %cst_18 [0] : vector<32x2xf32> to vector<2xf32>
    %28 = vector.shape_cast %27 : vector<2xf32> to vector<1x2xf32>
    %c0_19 = arith.constant 0 : index
    %c0_20 = arith.constant 0 : index
    %29 = vector.load %arg8[%c0_19, %c0_20] : memref<1x1xf32, #tpu.memory_space<vmem>>, vector<1x1xf32>
    %30 = vector.broadcast %29 : vector<1x1xf32> to vector<1x2xf32>
    %31 = arith.addf %28, %30 : vector<1x2xf32>
    %c0_21 = arith.constant 0 : index
    %c0_22 = arith.constant 0 : index
    %32 = vector.load %arg9[%c0_21, %c0_22] : memref<1x2xf32, #tpu.memory_space<vmem>>, vector<1x2xf32>
    tpu.vector_store %arg9[%c0_21, %c0_22], %31 {strides = array<i32>} : memref<1x2xf32, #tpu.memory_space<vmem>>, vector<1x2xf32>,
    return
  }
  func.func @transform_0(%arg0: i32) -> (i32, i32) {
    %c0_i32 = arith.constant 0 : i32
    %c0_i32_0 = arith.constant 0 : i32
    return %c0_i32, %arg0 : i32, i32
  }
  func.func @transform_1(%arg0: i32) -> (i32, i32) {
    %c0_i32 = arith.constant 0 : i32
    %c0_i32_0 = arith.constant 0 : i32
    return %c0_i32, %arg0 : i32, i32
  }
  func.func @transform_2(%arg0: i32) -> (i32, i32) {
    %c0_i32 = arith.constant 0 : i32
    %c0_i32_0 = arith.constant 0 : i32
    %c0_i32_1 = arith.constant 0 : i32
    return %c0_i32, %c0_i32_0 : i32, i32
  }
  func.func @transform_3(%arg0: i32) -> (i32, i32) {
    %c0_i32 = arith.constant 0 : i32
    %c0_i32_0 = arith.constant 0 : i32
    %c0_i32_1 = arith.constant 0 : i32
    return %c0_i32, %c0_i32_0 : i32, i32
  }
  func.func @transform_4(%arg0: i32) -> (i32, i32) {
    %c0_i32 = arith.constant 0 : i32
    %c0_i32_0 = arith.constant 0 : i32
    %c0_i32_1 = arith.constant 0 : i32
    return %c0_i32, %c0_i32_0 : i32, i32
  }
  func.func @transform_5(%arg0: i32) -> (i32, i32) {
    %c0_i32 = arith.constant 0 : i32
    %c0_i32_0 = arith.constant 0 : i32
    %c0_i32_1 = arith.constant 0 : i32
    return %c0_i32, %c0_i32_0 : i32, i32
  }
  func.func @transform_6(%arg0: i32) -> (i32, i32) {
    %c0_i32 = arith.constant 0 : i32
    %c0_i32_0 = arith.constant 0 : i32
    %c0_i32_1 = arith.constant 0 : i32
    return %c0_i32, %c0_i32_0 : i32, i32
  }
  func.func @transform_7(%arg0: i32) -> (i32, i32) {
    %c0_i32 = arith.constant 0 : i32
    %c0_i32_0 = arith.constant 0 : i32
    %c0_i32_1 = arith.constant 0 : i32
    return %c0_i32, %c0_i32_0 : i32, i32
  }
  func.func @transform_8(%arg0: i32) -> (i32, i32) {
    %c0_i32 = arith.constant 0 : i32
    %c0_i32_0 = arith.constant 0 : i32
    return %c0_i32, %arg0 : i32, i32
  }
}

</mosaic_0001>

<llo_original>
// kernel: critic_forward.1
$region0: #{critic_forward.1}
  #allocation0 [shape = 'u32[]', space=smem, size = 0x4, offset = 0x4, fixed_abs, tag = 'smem constant byte address 0x4 - core index']
  #allocation1 [shape = 'u32[144,128]{1,0:T(1,128)}', space=vmem, size = 0x12000, scoped, tag = 'internal scratch']
  #allocation2 [shape = 'f32[1,1]{1,0:T(1,128)S(1)}', space=vmem, size = 0x200, scoped, tag = 'scoped memory for critic_forward.1']
  %s0 = inlined_call_operand.vmem [shape: f32[4,512], index: 0, kind: input, shape index: {}]
  %s1 = inlined_call_operand.vmem [shape: f32[8,2], index: 1, kind: input, shape index: {}]
  %s2 = inlined_call_operand.vmem [shape: f32[32,4], index: 2, kind: input, shape index: {}]
  %s3 = inlined_call_operand.vmem [shape: f32[32,1], index: 3, kind: input, shape index: {}]
  %s4 = inlined_call_operand.vmem [shape: f32[32,40], index: 4, kind: input, shape index: {}]
  %s5 = inlined_call_operand.vmem [shape: f32[32,1], index: 5, kind: input, shape index: {}]
  %s6 = inlined_call_operand.vmem [shape: f32[32,1], index: 6, kind: input, shape index: {}]
  %s7 = inlined_call_operand.<no memory space> [shape: f32[1,1], index: 7, kind: input, shape index: {}]
  %s8 = inlined_call_operand.hbm [shape: f32[1,2], index: 8, kind: output, shape index: {}]
  %s9 = sld [smem:[#allocation0]]
  $region42: #{critic_forward.1} parent=0
    _
  %s11 = ssub.s32 1, %s9
  %s12 = scalar_select 0, %s11, %s9
  %v13 = vstv %s7
  %14 = vst [vmem:[#allocation2] sm:$0x1] %v13
  $region1: #{critic_forward.1} parent=0
    #allocation3 [shape = 'u8[512]{0}', space=vmem, size = 0x400, scoped, tag = 'output window, operand 0, single buffered']
    #allocation4 [shape = 's32[1]{0}', space=sflag, size = 0x4, scoped, tag = 'scoped memory for critic_forward.1']
    %15 = vsyncpa [#allocation4], 0
    // Predicated region
    $region2: #{critic_forward.1} parent=1 // pred_check
      _
    $region3: #{critic_forward.1} parent=1 // pred_check_branch
      %17 = sbr.rel (0) target = $region5
    $region4: #{critic_forward.1} parent=1 // pred_region
      _
    $region5: #{critic_forward.1} parent=1 // pred_fallthru
      _
    // Predicated region
    $region6: #{critic_forward.1} parent=1 // pred_check
      _
    $region7: #{critic_forward.1} parent=1 // pred_check_branch
      %19 = sbr.rel (0) target = $region9
    $region8: #{critic_forward.1} parent=1 // pred_region
      _
    $region9: #{critic_forward.1} parent=1 // pred_fallthru
      _
    // Predicated region
    $region10: #{critic_forward.1} parent=1 // pred_check
      _
    $region11: #{critic_forward.1} parent=1 // pred_check_branch
      %21 = sbr.rel (0) target = $region13
    $region12: #{critic_forward.1} parent=1 // pred_region
      _
    $region13: #{critic_forward.1} parent=1 // pred_fallthru
      _
    // Predicated region
    $region14: #{critic_forward.1} parent=1 // pred_check
      _
    $region15: #{critic_forward.1} parent=1 // pred_check_branch
      %23 = sbr.rel (0) target = $region17
    $region16: #{critic_forward.1} parent=1 // pred_region
      _
    $region17: #{critic_forward.1} parent=1 // pred_fallthru
      _
    // Predicated region
    $region18: #{critic_forward.1} parent=1 // pred_check
      _
    $region19: #{critic_forward.1} parent=1 // pred_check_branch
      %25 = sbr.rel (0) target = $region21
    $region20: #{critic_forward.1} parent=1 // pred_region
      _
    $region21: #{critic_forward.1} parent=1 // pred_fallthru
      _
    // Predicated region
    $region22: #{critic_forward.1} parent=1 // pred_check
      _
    $region23: #{critic_forward.1} parent=1 // pred_check_branch
      %27 = sbr.rel (0) target = $region25
    $region24: #{critic_forward.1} parent=1 // pred_region
      _
    $region25: #{critic_forward.1} parent=1 // pred_fallthru
      _
    // Predicated region
    $region26: #{critic_forward.1} parent=1 // pred_check
      _
    $region27: #{critic_forward.1} parent=1 // pred_check_branch
      %29 = sbr.rel (0) target = $region29
    $region28: #{critic_forward.1} parent=1 // pred_region
      _
    $region29: #{critic_forward.1} parent=1 // pred_fallthru
      _
    // Predicated region
    $region30: #{critic_forward.1} parent=1 // pred_check
      _
    $region31: #{critic_forward.1} parent=1 // pred_check_branch
      %31 = sbr.rel (0) target = $region33
    $region32: #{critic_forward.1} parent=1 // pred_region
      _
    $region33: #{critic_forward.1} parent=1 // pred_fallthru
      _
    %v32 = vld [vmem:[%s2] sm:$0xff]
    %v33 = vld [vmem:[%s2 + $0x8] sm:$0xff]
    %v34 = vld [vmem:[%s2 + $0x10] sm:$0xff]
    %v35 = vld [vmem:[%s2 + $0x18] sm:$0xff]
    %v36 = vld [vmem:[%s0] sm:$0xff]
    %v37 = vld [vmem:[%s0 + $0x8] sm:$0xff]
    %v38 = vld [vmem:[%s3] sm:$0xff]
    %v39 = vld [vmem:[%s3 + $0x8] sm:$0xff]
    %v40 = vld [vmem:[%s3 + $0x10] sm:$0xff]
    %v41 = vld [vmem:[%s3 + $0x18] sm:$0xff]
    %43 = vset.pattern.permute.xlu0 0
    %44 = vperm.xlu0 %43, %v38
    %v45 = vpop.permute.xlu0 %44
    %48 = vset.pattern.permute.xlu0 0
    %49 = vperm.xlu0 %48, %v39
    %v50 = vpop.permute.xlu0 %49
    %53 = vset.pattern.permute.xlu0 0
    %54 = vperm.xlu0 %53, %v40
    %v55 = vpop.permute.xlu0 %54
    %58 = vset.pattern.permute.xlu0 0
    %59 = vperm.xlu0 %58, %v41
    %v60 = vpop.permute.xlu0 %59
    %v64 = vcombine.high %v36, %v36
    %v65 = vcombine.high %v37, %v37
    %vm66 = vcmask 31744
    %v68 = vsel %vm66, %v32, 0
    %v71 = vsel %vm66, %v33, 0
    %v74 = vsel %vm66, %v34, 0
    %v77 = vsel %vm66, %v35, 0
    %vm79 = vcmask 1043456
    %v80 = vsel %vm79, %v36, 0
    %v82 = vsel %vm79, %v64, 0
    %v84 = vsel %vm79, %v37, 0
    %v86 = vsel %vm79, %v65, 0
    %88 = vmatprep.subr.mxu0 %v82
    %89 = vmatpush1.msra.mxu0 %v80
    %90 = vmatprep.subr.mxu0 0.0
    %91 = vmatpush1.msra.mxu0 0.0
    %92 = vmatprep.subr.mxu0 0.0
    %93 = vmatpush1.msra.mxu0 0.0
    %94 = vmatprep.subr.mxu0 0.0
    %95 = vmatpush1.msra.mxu0 0.0
    %96 = vmatprep.subr.mxu0 0.0
    %97 = vmatpush1.msra.mxu0 0.0
    %98 = vmatprep.subr.mxu0 0.0
    %99 = vmatpush1.msra.mxu0 0.0
    %100 = vmatprep.subr.mxu0 0.0
    %101 = vmatpush1.msra.mxu0 0.0
    %102 = vmatprep.subr.mxu0 0.0
    %103 = vmatpush1.msra.mxu0 0.0
    %104 = vmatprep.subr.mxu0 0.0
    %105 = vmatpush1.msra.mxu0 0.0
    %106 = vmatprep.subr.mxu0 0.0
    %107 = vmatpush1.msra.mxu0 0.0
    %108 = vmatprep.subr.mxu0 0.0
    %109 = vmatpush1.msra.mxu0 0.0
    %110 = vmatprep.subr.mxu0 0.0
    %111 = vmatpush1.msra.mxu0 0.0
    %112 = vmatprep.subr.mxu0 0.0
    %113 = vmatpush1.msra.mxu0 0.0
    %114 = vmatprep.subr.mxu0 0.0
    %115 = vmatpush1.msra.mxu0 0.0
    %116 = vmatprep.subr.mxu0 0.0
    %117 = vmatpush1.msra.mxu0 0.0
    %118 = vmatprep.subr.mxu0 0.0
    %119 = vmatpush1.msra.mxu0 0.0
    %120 = vmatprep.subr.mxu0 0.0
    %121 = vmatpush1.msra.mxu0 0.0
    %122 = vmatprep.subr.mxu0 0.0
    %123 = vmatpush1.msra.mxu0 0.0
    %124 = vmatprep.subr.mxu0 0.0
    %125 = vmatpush1.msra.mxu0 0.0
    %126 = vmatprep.subr.mxu0 0.0
    %127 = vmatpush1.msra.mxu0 0.0
    %128 = vmatprep.subr.mxu0 0.0
    %129 = vmatpush1.msra.mxu0 0.0
    %130 = vmatprep.subr.mxu0 0.0
    %131 = vmatpush1.msra.mxu0 0.0
    %132 = vmatprep.subr.mxu0 0.0
    %133 = vmatpush1.msra.mxu0 0.0
    %134 = vmatprep.subr.mxu0 0.0
    %135 = vmatpush1.msra.mxu0 0.0
    %136 = vmatprep.subr.mxu0 0.0
    %137 = vmatpush1.msra.mxu0 0.0
    %138 = vmatprep.subr.mxu0 0.0
    %139 = vmatpush1.msra.mxu0 0.0
    %140 = vmatprep.subr.mxu0 0.0
    %141 = vmatpush1.msra.mxu0 0.0
    %142 = vmatprep.subr.mxu0 0.0
    %143 = vmatpush1.msra.mxu0 0.0
    %144 = vmatprep.subr.mxu0 0.0
    %145 = vmatpush1.msra.mxu0 0.0
    %146 = vmatprep.subr.mxu0 0.0
    %147 = vmatpush1.msra.mxu0 0.0
    %148 = vmatprep.subr.mxu0 0.0
    %149 = vmatpush1.msra.mxu0 0.0
    %150 = vmatprep.subr.mxu0 0.0
    %151 = vmatpush1.msra.mxu0 0.0
    %152 = vmatprep.mubr.f32.mxu0 0.0
    %153 = vmatmul.mubr.f32.gmra.mrb[0].mxu0 %v68
    %v154 = vpop.f32.mrb[0].mxu0
    %v155 = vadd.f32 %v45, %v154
    %v156 = vpop.f32.mrb[0].mxu0
    %v157 = vadd.f32 %v45, %v156
    %158 = vmatprep.mubr.f32.mxu0 0.0
    %159 = vmatmul.mubr.f32.gmra.mrb[0].mxu0 %v71
    %v160 = vpop.f32.mrb[0].mxu0
    %v161 = vadd.f32 %v50, %v160
    %v162 = vpop.f32.mrb[0].mxu0
    %v163 = vadd.f32 %v50, %v162
    %164 = vmatprep.mubr.f32.mxu0 0.0
    %165 = vmatmul.mubr.f32.gmra.mrb[0].mxu0 %v74
    %v166 = vpop.f32.mrb[0].mxu0
    %v167 = vadd.f32 %v55, %v166
    %v168 = vpop.f32.mrb[0].mxu0
    %v169 = vadd.f32 %v55, %v168
    %170 = vmatprep.mubr.f32.mxu0 0.0
    %171 = vmatmul.mubr.f32.gmra.mrb[0].mxu0 %v77
    %v172 = vpop.f32.mrb[0].mxu0
    %v173 = vadd.f32 %v60, %v172
    %v174 = vpop.f32.mrb[0].mxu0
    %v175 = vadd.f32 %v60, %v174
    %176 = vdwg.mxu0
    %177 = vmatprep.subr.mxu0 %v86
    %178 = vmatpush1.msra.mxu0 %v84
    %179 = vmatprep.subr.mxu0 0.0
    %180 = vmatpush1.msra.mxu0 0.0
    %181 = vmatprep.subr.mxu0 0.0
    %182 = vmatpush1.msra.mxu0 0.0
    %183 = vmatprep.subr.mxu0 0.0
    %184 = vmatpush1.msra.mxu0 0.0
    %185 = vmatprep.subr.mxu0 0.0
    %186 = vmatpush1.msra.mxu0 0.0
    %187 = vmatprep.subr.mxu0 0.0
    %188 = vmatpush1.msra.mxu0 0.0
    %189 = vmatprep.subr.mxu0 0.0
    %190 = vmatpush1.msra.mxu0 0.0
    %191 = vmatprep.subr.mxu0 0.0
    %192 = vmatpush1.msra.mxu0 0.0
    %193 = vmatprep.subr.mxu0 0.0
    %194 = vmatpush1.msra.mxu0 0.0
    %195 = vmatprep.subr.mxu0 0.0
    %196 = vmatpush1.msra.mxu0 0.0
    %197 = vmatprep.subr.mxu0 0.0
    %198 = vmatpush1.msra.mxu0 0.0
    %199 = vmatprep.subr.mxu0 0.0
    %200 = vmatpush1.msra.mxu0 0.0
    %201 = vmatprep.subr.mxu0 0.0
    %202 = vmatpush1.msra.mxu0 0.0
    %203 = vmatprep.subr.mxu0 0.0
    %204 = vmatpush1.msra.mxu0 0.0
    %205 = vmatprep.subr.mxu0 0.0
    %206 = vmatpush1.msra.mxu0 0.0
    %207 = vmatprep.subr.mxu0 0.0
    %208 = vmatpush1.msra.mxu0 0.0
    %209 = vmatprep.subr.mxu0 0.0
    %210 = vmatpush1.msra.mxu0 0.0
    %211 = vmatprep.subr.mxu0 0.0
    %212 = vmatpush1.msra.mxu0 0.0
    %213 = vmatprep.subr.mxu0 0.0
    %214 = vmatpush1.msra.mxu0 0.0
    %215 = vmatprep.subr.mxu0 0.0
    %216 = vmatpush1.msra.mxu0 0.0
    %217 = vmatprep.subr.mxu0 0.0
    %218 = vmatpush1.msra.mxu0 0.0
    %219 = vmatprep.subr.mxu0 0.0
    %220 = vmatpush1.msra.mxu0 0.0
    %221 = vmatprep.subr.mxu0 0.0
    %222 = vmatpush1.msra.mxu0 0.0
    %223 = vmatprep.subr.mxu0 0.0
    %224 = vmatpush1.msra.mxu0 0.0
    %225 = vmatprep.subr.mxu0 0.0
    %226 = vmatpush1.msra.mxu0 0.0
    %227 = vmatprep.subr.mxu0 0.0
    %228 = vmatpush1.msra.mxu0 0.0
    %229 = vmatprep.subr.mxu0 0.0
    %230 = vmatpush1.msra.mxu0 0.0
    %231 = vmatprep.subr.mxu0 0.0
    %232 = vmatpush1.msra.mxu0 0.0
    %233 = vmatprep.subr.mxu0 0.0
    %234 = vmatpush1.msra.mxu0 0.0
    %235 = vmatprep.subr.mxu0 0.0
    %236 = vmatpush1.msra.mxu0 0.0
    %237 = vmatprep.subr.mxu0 0.0
    %238 = vmatpush1.msra.mxu0 0.0
    %239 = vmatprep.subr.mxu0 0.0
    %240 = vmatpush1.msra.mxu0 0.0
    %241 = vmatprep.mubr.f32.mxu0 0.0
    %242 = vmatmul.mubr.f32.gmra.mrb[0].mxu0 %v68
    %v243 = vpop.f32.mrb[0].mxu0
    %v244 = vadd.f32 %v45, %v243
    %v245 = vpop.f32.mrb[0].mxu0
    %v246 = vadd.f32 %v45, %v245
    %247 = vmatprep.mubr.f32.mxu0 0.0
    %248 = vmatmul.mubr.f32.gmra.mrb[0].mxu0 %v71
    %v249 = vpop.f32.mrb[0].mxu0
    %v250 = vadd.f32 %v50, %v249
    %v251 = vpop.f32.mrb[0].mxu0
    %v252 = vadd.f32 %v50, %v251
    %253 = vmatprep.mubr.f32.mxu0 0.0
    %254 = vmatmul.mubr.f32.gmra.mrb[0].mxu0 %v74
    %v255 = vpop.f32.mrb[0].mxu0
    %v256 = vadd.f32 %v55, %v255
    %v257 = vpop.f32.mrb[0].mxu0
    %v258 = vadd.f32 %v55, %v257
    %259 = vmatprep.mubr.f32.mxu0 0.0
    %260 = vmatmul.mubr.f32.gmra.mrb[0].mxu0 %v77
    %v261 = vpop.f32.mrb[0].mxu0
    %v262 = vadd.f32 %v60, %v261
    %v263 = vpop.f32.mrb[0].mxu0
    %v264 = vadd.f32 %v60, %v263
    %265 = vdwg.mxu0
    %v266 = vmax.f32 %v155, 0.0
    %v267 = vmax.f32 %v157, 0.0
    %v268 = vmax.f32 %v244, 0.0
    %v269 = vmax.f32 %v246, 0.0
    %v270 = vmax.f32 %v161, 0.0
    %v271 = vmax.f32 %v163, 0.0
    %v272 = vmax.f32 %v250, 0.0
    %v273 = vmax.f32 %v252, 0.0
    %v274 = vmax.f32 %v167, 0.0
    %v275 = vmax.f32 %v169, 0.0
    %v276 = vmax.f32 %v256, 0.0
    %v277 = vmax.f32 %v258, 0.0
    %v278 = vmax.f32 %v173, 0.0
    %v279 = vmax.f32 %v175, 0.0
    %v280 = vmax.f32 %v262, 0.0
    %v281 = vmax.f32 %v264, 0.0
    %v282 = vadd.f32 %v266, %v267
    %283 = vadd.xlane.f32.xlu0 %v282
    %v284 = vpop.xlane.xlu0 %283
    %v285 = vadd.f32 %v270, %v271
    %286 = vadd.xlane.f32.xlu0 %v285
    %v287 = vpop.xlane.xlu0 %286
    %v288 = vadd.f32 %v274, %v275
    %289 = vadd.xlane.f32.xlu0 %v288
    %v290 = vpop.xlane.xlu0 %289
    %v291 = vadd.f32 %v278, %v279
    %292 = vadd.xlane.f32.xlu0 %v291
    %v293 = vpop.xlane.xlu0 %292
    %v294 = vadd.f32 %v268, %v269
    %295 = vadd.xlane.f32.xlu0 %v294
    %v296 = vpop.xlane.xlu0 %295
    %v297 = vadd.f32 %v272, %v273
    %298 = vadd.xlane.f32.xlu0 %v297
    %v299 = vpop.xlane.xlu0 %298
    %v300 = vadd.f32 %v276, %v277
    %301 = vadd.xlane.f32.xlu0 %v300
    %v302 = vpop.xlane.xlu0 %301
    %v303 = vadd.f32 %v280, %v281
    %304 = vadd.xlane.f32.xlu0 %v303
    %v305 = vpop.xlane.xlu0 %304
    %vm306 = vcmask 7168
    %v307 = vsel %vm306, %v284, %v296
    %v308 = vsel %vm306, %v287, %v299
    %v309 = vsel %vm306, %v290, %v302
    %v310 = vsel %vm306, %v293, %v305
    %v311 = vld [vmem:[%s1] sm:$0xff]
    %v312 = vld [vmem:[%s4] sm:$0xff]
    %v313 = vld [vmem:[%s4 + $0x8] sm:$0xff]
    %v314 = vld [vmem:[%s4 + $0x10] sm:$0xff]
    %v315 = vld [vmem:[%s4 + $0x18] sm:$0xff]
    %v316 = vld [vmem:[%s5] sm:$0xff]
    %v317 = vld [vmem:[%s5 + $0x8] sm:$0xff]
    %v318 = vld [vmem:[%s5 + $0x10] sm:$0xff]
    %v319 = vld [vmem:[%s5 + $0x18] sm:$0xff]
    %321 = vset.pattern.permute.xlu0 0
    %322 = vperm.xlu0 %321, %v316
    %v323 = vpop.permute.xlu0 %322
    %326 = vset.pattern.permute.xlu0 0
    %327 = vperm.xlu0 %326, %v317
    %v328 = vpop.permute.xlu0 %327
    %331 = vset.pattern.permute.xlu0 0
    %332 = vperm.xlu0 %331, %v318
    %v333 = vpop.permute.xlu0 %332
    %336 = vset.pattern.permute.xlu0 0
    %337 = vperm.xlu0 %336, %v319
    %v338 = vpop.permute.xlu0 %337
    %vm340 = vcmask 326656
    %v342 = vsel %vm340, %v312, 0
    %v345 = vsel %vm340, %v313, 0
    %v348 = vsel %vm340, %v314, 0
    %v351 = vsel %vm340, %v315, 0
    %353 = vmatprep.subr.mxu0 0.0
    %354 = vmatpush1.msra.mxu0 %v307
    %355 = vmatprep.subr.mxu0 0.0
    %356 = vmatpush1.msra.mxu0 %v308
    %357 = vmatprep.subr.mxu0 0.0
    %358 = vmatpush1.msra.mxu0 %v309
    %359 = vmatprep.subr.mxu0 0.0
    %360 = vmatpush1.msra.mxu0 %v310
    %361 = vmatprep.subr.mxu0 0.0
    %362 = vmatpush1.msra.mxu0 %v311
    %363 = vmatprep.subr.mxu0 0.0
    %364 = vmatpush1.msra.mxu0 0.0
    %365 = vmatprep.subr.mxu0 0.0
    %366 = vmatpush1.msra.mxu0 0.0
    %367 = vmatprep.subr.mxu0 0.0
    %368 = vmatpush1.msra.mxu0 0.0
    %369 = vmatprep.subr.mxu0 0.0
    %370 = vmatpush1.msra.mxu0 0.0
    %371 = vmatprep.subr.mxu0 0.0
    %372 = vmatpush1.msra.mxu0 0.0
    %373 = vmatprep.subr.mxu0 0.0
    %374 = vmatpush1.msra.mxu0 0.0
    %375 = vmatprep.subr.mxu0 0.0
    %376 = vmatpush1.msra.mxu0 0.0
    %377 = vmatprep.subr.mxu0 0.0
    %378 = vmatpush1.msra.mxu0 0.0
    %379 = vmatprep.subr.mxu0 0.0
    %380 = vmatpush1.msra.mxu0 0.0
    %381 = vmatprep.subr.mxu0 0.0
    %382 = vmatpush1.msra.mxu0 0.0
    %383 = vmatprep.subr.mxu0 0.0
    %384 = vmatpush1.msra.mxu0 0.0
    %385 = vmatprep.subr.mxu0 0.0
    %386 = vmatpush1.msra.mxu0 0.0
    %387 = vmatprep.subr.mxu0 0.0
    %388 = vmatpush1.msra.mxu0 0.0
    %389 = vmatprep.subr.mxu0 0.0
    %390 = vmatpush1.msra.mxu0 0.0
    %391 = vmatprep.subr.mxu0 0.0
    %392 = vmatpush1.msra.mxu0 0.0
    %393 = vmatprep.subr.mxu0 0.0
    %394 = vmatpush1.msra.mxu0 0.0
    %395 = vmatprep.subr.mxu0 0.0
    %396 = vmatpush1.msra.mxu0 0.0
    %397 = vmatprep.subr.mxu0 0.0
    %398 = vmatpush1.msra.mxu0 0.0
    %399 = vmatprep.subr.mxu0 0.0
    %400 = vmatpush1.msra.mxu0 0.0
    %401 = vmatprep.subr.mxu0 0.0
    %402 = vmatpush1.msra.mxu0 0.0
    %403 = vmatprep.subr.mxu0 0.0
    %404 = vmatpush1.msra.mxu0 0.0
    %405 = vmatprep.subr.mxu0 0.0
    %406 = vmatpush1.msra.mxu0 0.0
    %407 = vmatprep.subr.mxu0 0.0
    %408 = vmatpush1.msra.mxu0 0.0
    %409 = vmatprep.subr.mxu0 0.0
    %410 = vmatpush1.msra.mxu0 0.0
    %411 = vmatprep.subr.mxu0 0.0
    %412 = vmatpush1.msra.mxu0 0.0
    %413 = vmatprep.subr.mxu0 0.0
    %414 = vmatpush1.msra.mxu0 0.0
    %415 = vmatprep.subr.mxu0 0.0
    %416 = vmatpush1.msra.mxu0 0.0
    %417 = vmatprep.mubr.f32.mxu0 0.0
    %418 = vmatmul.mubr.f32.gmra.mrb[0].mxu0 %v342
    %v419 = vpop.f32.mrb[0].mxu0
    %v420 = vadd.f32 %v323, %v419
    %v421 = vpop.f32.mrb[0].mxu0
    %422 = vmatprep.mubr.f32.mxu0 0.0
    %423 = vmatmul.mubr.f32.gmra.mrb[0].mxu0 %v345
    %v424 = vpop.f32.mrb[0].mxu0
    %v425 = vadd.f32 %v328, %v424
    %v426 = vpop.f32.mrb[0].mxu0
    %427 = vmatprep.mubr.f32.mxu0 0.0
    %428 = vmatmul.mubr.f32.gmra.mrb[0].mxu0 %v348
    %v429 = vpop.f32.mrb[0].mxu0
    %v430 = vadd.f32 %v333, %v429
    %v431 = vpop.f32.mrb[0].mxu0
    %432 = vmatprep.mubr.f32.mxu0 0.0
    %433 = vmatmul.mubr.f32.gmra.mrb[0].mxu0 %v351
    %v434 = vpop.f32.mrb[0].mxu0
    %v435 = vadd.f32 %v338, %v434
    %v436 = vpop.f32.mrb[0].mxu0
    %437 = vdwg.mxu0
    %v438 = vmax.f32 %v420, 0.0
    %v439 = vmax.f32 %v425, 0.0
    %v440 = vmax.f32 %v430, 0.0
    %v441 = vmax.f32 %v435, 0.0
    %v442 = vld [vmem:[%s6] sm:$0xff]
    %v443 = vld [vmem:[%s6 + $0x8] sm:$0xff]
    %v444 = vld [vmem:[%s6 + $0x10] sm:$0xff]
    %v445 = vld [vmem:[%s6 + $0x18] sm:$0xff]
    %447 = vset.pattern.permute.xlu0 0
    %448 = vperm.xlu0 %447, %v442
    %v449 = vpop.permute.xlu0 %448
    %452 = vset.pattern.permute.xlu0 0
    %453 = vperm.xlu0 %452, %v443
    %v454 = vpop.permute.xlu0 %453
    %457 = vset.pattern.permute.xlu0 0
    %458 = vperm.xlu0 %457, %v444
    %v459 = vpop.permute.xlu0 %458
    %462 = vset.pattern.permute.xlu0 0
    %463 = vperm.xlu0 %462, %v445
    %v464 = vpop.permute.xlu0 %463
    %v466 = vmul.f32 %v438, %v449
    %v467 = vmul.f32 %v439, %v454
    %v468 = vmul.f32 %v440, %v459
    %v469 = vmul.f32 %v441, %v464
    %vm470 = vcmask 15360
    %v471 = vsel %vm470, %v466, 0.0
    %v472 = vsel %vm470, %v467, 0.0
    %v473 = vadd.f32 %v471, %v472
    %v474 = vsel %vm470, %v468, 0.0
    %v475 = vadd.f32 %v473, %v474
    %v476 = vsel %vm470, %v469, 0.0
    %v477 = vadd.f32 %v475, %v476
    %v478 = vrot.slane %v477, 4
    %v479 = vadd.f32 %v477, %v478
    %v480 = vrot.slane %v479, 2
    %v481 = vadd.f32 %v479, %v480
    %v482 = vrot.slane %v481, 1
    %v483 = vadd.f32 %v481, %v482
    %v484 = vld [vmem:[#allocation2] sm:$0x1]
    %486 = vset.pattern.permute.xlu0 0
    %487 = vperm.xlu0 %486, %v484
    %v488 = vpop.permute.xlu0 %487
    %v490 = vlaneseq
    %v491 = vshrl.u32 %v490, 7
    %v492 = vsub.s32 0, %v491
    %v493 = vrot.slane %v488, %v492
    %v494 = vadd.f32 %v483, %v493
    %vm495 = vcmask 8192
    %496 = vst.msk [vmem:[#allocation3] sm:$0x1] %vm495, %v494
    // Predicated region
    $region34: #{critic_forward.1} parent=1 // pred_check
      _
    $region35: #{critic_forward.1} parent=1 // pred_check_branch
      %498 = sbr.rel (0) target = $region37
    $region36: #{critic_forward.1} parent=1 // pred_region
      %s500 = ssub.s32 16, 16
      %501 = vsyncadd [#allocation4], %s500
      %s503 = sshll.u32 [#allocation3], 4
      %s504 = int_to_ptr.vmem [resolvable:$true] %s503
      %506 = dma.vmem_to_hbm [thread:$0]  %s504, 16, %s8, [#allocation4]
    $region37: #{critic_forward.1} parent=1 // pred_fallthru
      _
    // Predicated region
    $region38: #{critic_forward.1} parent=1 // pred_check
      _
    $region39: #{critic_forward.1} parent=1 // pred_check_branch
      %508 = sbr.rel (0) target = $region41
    $region40: #{critic_forward.1} parent=1 // pred_region
      %509 = dma.done [#allocation4], 16
    $region41: #{critic_forward.1} parent=1 // pred_fallthru
      _
    %510 = vsyncpa [#allocation4], 1

</llo_original>
